<compile_context>
chip_gen: v7x
topology: tpu7x:2x2x1
jax: 0.10.0
libtpu: 0.0.40
codegen_flags: <defaults>
</compile_context>

<pallas_src>
import functools
import math

import jax
import jax.numpy as jnp
import numpy as np
from jax.experimental import pallas as pl
from jax.experimental.pallas import tpu as pltpu


def _sinpos_kernel(x_ref, o_ref, *, padding_idx, embed_dim, half_dim, tile_s):
    # x_ref: (1, tile_s, 1) int32 token ids; o_ref: (1, tile_s, embed_dim) f32.
    s_blk = pl.program_id(1)

    # Absolute position t + padding_idx + 1 for every row of this tile,
    # broadcast over the lane (embed_dim) axis.
    row = jax.lax.broadcasted_iota(jnp.int32, (tile_s, embed_dim), 0)
    pos = (row + s_blk * tile_s + (padding_idx + 1)).astype(jnp.float32)

    # Lane index -> (sin|cos half, frequency index).  Computing the table
    # in-register avoids a concatenate and keeps everything lane-parallel.
    lane = jax.lax.broadcasted_iota(jnp.int32, (tile_s, embed_dim), 1)
    freq_idx = jnp.where(lane < half_dim, lane, lane - half_dim)
    log_ts = math.log(10000.0) / (half_dim - 1)
    inv_freq = jnp.exp(freq_idx.astype(jnp.float32) * jnp.float32(-log_ts))

    angle = pos * inv_freq
    emb = jnp.where(lane < half_dim, jnp.sin(angle), jnp.cos(angle))
    if embed_dim % 2 == 1:
        # Odd embed_dim: last column is the zero padding column of the table.
        emb = jnp.where(lane < 2 * half_dim, emb, 0.0)

    # Padding tokens map to weights[padding_idx] == 0 -> single select.
    keep = x_ref[0, :, :] != padding_idx          # (tile_s, 1), broadcasts over lanes
    o_ref[0, :, :] = jnp.where(keep, emb, 0.0)


def sinusoidal_positional_embedding(x, embed_dim, padding_idx, *, tile_s=512):
    """Fused Pallas forward pass. x: (bsz, seq_len) int token ids."""
    bsz, seq_len = x.shape
    half_dim = embed_dim // 2

    tile_s = min(int(tile_s), int(seq_len))
    if tile_s < seq_len:
        # When the block does not span the whole seq axis its second-to-last
        # dim must be a multiple of 8.
        tile_s = max(8, (tile_s // 8) * 8)

    grid = (bsz, pl.cdiv(seq_len, tile_s))
    x3 = x.astype(jnp.int32)[..., None]           # (bsz, seq_len, 1) -- free reshape

    kernel = functools.partial(
        _sinpos_kernel,
        padding_idx=int(padding_idx),
        embed_dim=int(embed_dim),
        half_dim=int(half_dim),
        tile_s=int(tile_s),
    )

    return pl.pallas_call(
        kernel,
        out_shape=jax.ShapeDtypeStruct((bsz, seq_len, embed_dim), jnp.float32),
        grid=grid,
        in_specs=[pl.BlockSpec((1, tile_s, 1), lambda b, s: (b, s, 0))],
        out_specs=pl.BlockSpec((1, tile_s, embed_dim), lambda b, s: (b, s, 0)),
        compiler_params=pltpu.CompilerParams(
            dimension_semantics=("parallel", "parallel")),
    )(x3)


class SinusoidalPositionalEmbedding:
    """JAX/Pallas port of the PyTorch module (forward pass only).

    The PyTorch module's lazily-cached `self.weights` buffer and `.detach()`
    are irrelevant here: the embedding is recomputed on the fly inside the
    kernel (cheaper than an HBM table + gather) and JAX arrays carry no grad
    tape to detach.
    """

    def __init__(self, embed_dim, padding_idx):
        self.embed_dim = int(embed_dim)
        self.padding_idx = int(padding_idx)

    def __call__(self, x):
        return sinusoidal_positional_embedding(x, self.embed_dim, self.padding_idx)


def _reference(x, embed_dim, padding_idx):
    """NumPy transliteration of the PyTorch module for verification."""
    x = np.asarray(x)
    bsz, seq_len = x.shape
    max_pos = padding_idx + 1 + seq_len
    half_dim = embed_dim // 2
    scale = math.log(10000.0) / (half_dim - 1)
    inv_freq = np.exp(np.arange(half_dim, dtype=np.float64) * -scale)
    ang = np.arange(max_pos, dtype=np.float64)[:, None] * inv_freq[None, :]
    weights = np.concatenate([np.sin(ang), np.cos(ang)], axis=1)
    if embed_dim % 2 == 1:
        weights = np.concatenate([weights, np.zeros((max_pos, 1))], axis=1)
    weights[padding_idx, :] = 0.0
    mask = (x != padding_idx).astype(np.int64)
    positions = (np.arange(seq_len)[None, :] + padding_idx + 1) * mask \
        + padding_idx * (1 - mask)
    return weights[positions.reshape(-1)].reshape(bsz, seq_len, embed_dim)


if __name__ == "__main__":
    key = jax.random.PRNGKey(0)
    bsz, seq_len, embed_dim, padding_idx = 2, 16, 32, 1

    # Token ids with a few padding tokens sprinkled in.
    x = jax.random.randint(key, (bsz, seq_len), 4, 30, dtype=jnp.int32)
    x = x.at[1, -3:].set(padding_idx)
    x = x.at[0, 5].set(padding_idx)

    module = SinusoidalPositionalEmbedding(embed_dim, padding_idx)
    out = jax.block_until_ready(module(x))

    ref = _reference(x, embed_dim, padding_idx)
    assert out.shape == (bsz, seq_len, embed_dim)
    assert np.allclose(np.asarray(out), ref, atol=1e-4, rtol=1e-4)
    print("KERNEL_OK")
</pallas_src>

<mosaic_0001>
module attributes {stable_mosaic.version = 11 : i64} {
  func.func @_sinpos_kernel(%arg0: i32, %arg1: i32, %arg2: memref<1x16x1xi32, #tpu.memory_space<vmem>>, %arg3: memref<1x16x32xf32, #tpu.memory_space<vmem>>) attributes {dimension_semantics = [#tpu.dimension_semantics<parallel>, #tpu.dimension_semantics<parallel>], iteration_bounds = array<i64: 2, 1>, scalar_prefetch = 0 : i64, scratch_operands = 0 : i64, tpu.core_type = #tpu.core_type<tc>, window_params = [{transform_indices = @transform_0, window_bounds = array<i64: 1, 16, 1>}, {transform_indices = @transform_1, window_bounds = array<i64: 1, 16, 32>}]} {
    %0 = tpu.iota {dimensions = array<i32: 0>} : vector<16x32xi32>
    %c16_i32 = arith.constant 16 : i32
    %1 = arith.muli %arg1, %c16_i32 : i32
    %2 = vector.broadcast %1 : i32 to vector<16x32xi32>
    %3 = arith.addi %0, %2 : vector<16x32xi32>
    %c2_i32 = arith.constant 2 : i32
    %4 = vector.broadcast %c2_i32 : i32 to vector<16x32xi32>
    %5 = arith.addi %3, %4 : vector<16x32xi32>
    %6 = arith.sitofp %5 : vector<16x32xi32> to vector<16x32xf32>
    %7 = tpu.iota {dimensions = array<i32: 1>} : vector<16x32xi32>
    %c16_i32_0 = arith.constant 16 : i32
    %8 = vector.broadcast %c16_i32_0 : i32 to vector<16x32xi32>
    %9 = arith.cmpi slt, %7, %8 : vector<16x32xi32>
    %c16_i32_1 = arith.constant 16 : i32
    %10 = vector.broadcast %c16_i32_1 : i32 to vector<16x32xi32>
    %11 = arith.subi %7, %10 : vector<16x32xi32>
    %12 = arith.select %9, %7, %11 : vector<16x32xi1>, vector<16x32xi32>
    %13 = arith.sitofp %12 : vector<16x32xi32> to vector<16x32xf32>
    %cst = arith.constant -0.614022672 : f32
    %14 = vector.broadcast %cst : f32 to vector<16x32xf32>
    %15 = arith.mulf %13, %14 : vector<16x32xf32>
    %16 = math.exp %15 : vector<16x32xf32>
    %17 = arith.mulf %6, %16 : vector<16x32xf32>
    %c16_i32_2 = arith.constant 16 : i32
    %18 = vector.broadcast %c16_i32_2 : i32 to vector<16x32xi32>
    %19 = arith.cmpi slt, %7, %18 : vector<16x32xi32>
    %20 = math.sin %17 : vector<16x32xf32>
    %21 = math.cos %17 : vector<16x32xf32>
    %22 = arith.select %19, %20, %21 : vector<16x32xi1>, vector<16x32xf32>
    %c0 = arith.constant 0 : index
    %c0_3 = arith.constant 0 : index
    %c0_4 = arith.constant 0 : index
    %23 = vector.load %arg2[%c0, %c0_3, %c0_4] : memref<1x16x1xi32, #tpu.memory_space<vmem>>, vector<1x16x1xi32>
    %24 = vector.shape_cast %23 : vector<1x16x1xi32> to vector<16x1xi32>
    %c1_i32 = arith.constant 1 : i32
    %25 = vector.broadcast %c1_i32 : i32 to vector<16x1xi32>
    %26 = arith.cmpi ne, %24, %25 : vector<16x1xi32>
    %cst_5 = arith.constant 0.000000e+00 : f32
    %27 = vector.shape_cast %26 : vector<16x1xi1> to vector<16x1xi1>
    %28 = vector.broadcast %27 : vector<16x1xi1> to vector<16x32xi1>
    %29 = vector.broadcast %cst_5 : f32 to vector<16x32xf32>
    %30 = arith.select %28, %22, %29 : vector<16x32xi1>, vector<16x32xf32>
    %c0_6 = arith.constant 0 : index
    %c0_7 = arith.constant 0 : index
    %c0_8 = arith.constant 0 : index
    %31 = vector.load %arg3[%c0_6, %c0_7, %c0_8] : memref<1x16x32xf32, #tpu.memory_space<vmem>>, vector<1x16x32xf32>
    %32 = vector.shape_cast %31 : vector<1x16x32xf32> to vector<16x32xf32>
    %33 = vector.shape_cast %30 : vector<16x32xf32> to vector<1x16x32xf32>
    tpu.vector_store %arg3[%c0_6, %c0_7, %c0_8], %33 {strides = array<i32>} : memref<1x16x32xf32, #tpu.memory_space<vmem>>, vector<1x16x32xf32>,
    return
  }
  func.func @transform_0(%arg0: i32, %arg1: i32) -> (i32, i32, i32) {
    %c0_i32 = arith.constant 0 : i32
    %c0_i32_0 = arith.constant 0 : i32
    return %arg0, %arg1, %c0_i32 : i32, i32, i32
  }
  func.func @transform_1(%arg0: i32, %arg1: i32) -> (i32, i32, i32) {
    %c0_i32 = arith.constant 0 : i32
    %c0_i32_0 = arith.constant 0 : i32
    return %arg0, %arg1, %c0_i32 : i32, i32, i32
  }
}

</mosaic_0001>

<llo_original>
// kernel: tpu_custom_call.1
$region0: #{tpu_custom_call.1}
  #allocation0 [shape = 'u32[]', space=smem, size = 0x4, offset = 0x4, fixed_abs, tag = 'smem constant byte address 0x4 - core index']
  #allocation1 [shape = 'u32[144,128]{1,0:T(1,128)}', space=vmem, size = 0x12000, scoped, tag = 'internal scratch']
  %s0 = inlined_call_operand.vmem [shape: s32[2,16,1], index: 0, kind: input, shape index: {}]
  %s1 = inlined_call_operand.hbm [shape: f32[2,16,32], index: 1, kind: output, shape index: {}]
  %s2 = sld [smem:[#allocation0]]
  $region37: #{tpu_custom_call.1} parent=0
    _
  %s4 = ssub.s32 1, %s2
  %s5 = scalar_select 0, %s4, %s2
  $region1: #{tpu_custom_call.1} parent=0
    #allocation2 [shape = 'u8[16384]{0}', space=vmem, size = 0x4000, scoped, tag = 'output window, operand 0']
    #allocation3 [shape = 's32[2]{0}', space=sflag, size = 0x8, scoped, tag = 'scoped memory for tpu_custom_call.1']
    %6 = vsyncpa [#allocation3], 0
    %s7 = scalar_lea.sflag [#allocation3], 1
    %8 = vsyncpa %s7, 0
    loop: start=0, step=1, limit=4
    $region2: #{tpu_custom_call.1} parent=1 // loop_pre_header
      _
    $region3: #{tpu_custom_call.1} parent=1 // loop_header
      %s10 = sphi 0, %s14
      %p11 = scmp.ge.s32.totalorder %s10, 4
      %s17 = sphi 0, %s29
      %s18 = sphi 0, %s25
      %s19 = sphi 0, %s17
      %s20 = sphi 0, %s18
      %s21 = sphi 0, %s19
      %s22 = sphi 0, %s20
      %s34 = sphi 0, %s36
      %s37 = sphi 0, %s34
      %s38 = sphi 0, %s37
      %s54 = sphi 0, %s38
      %s62 = sphi 0, %s64
      %s65 = sphi 0, %s62
      %s66 = sphi 0, %s65
      %s82 = sphi 0, %s66
    $region4: #{tpu_custom_call.1} parent=1 // loop_header_branch
      %13 = sbr.rel (%p11) target = $region8
    $region5: #{tpu_custom_call.1} parent=1 // loop_body
      %s15 = ssub.s32 %s10, 1
      %s16 = ssub.s32 %s10, 2
      %s23 = sadd.s32 1, %s18
      %p24 = scmp.ge.s32.totalorder %s23, 1
      %s25 = scalar_select %p24, 0, %s23
      %s26 = sadd.s32 1, %s17
      %s27 = scalar_select %p24, %s26, %s17
      %p28 = scmp.ge.s32.totalorder %s27, 2
      %s29 = scalar_select %p28, 0, %s27
      %s30 = ssub.s32 %s17, %s29
      %s31 = ssub.s32 %s18, %s25
      %s32 = sor.u32 %s30, %s31
      %p33 = scmp.eq.s32.totalorder %s32, 0
      %s35 = sadd.s32 %s34, 1
      %s36 = scalar_select %p33, %s34, %s35
      %p39 = pneg %p33
      %p40 = scmp.eq.s32.totalorder %s10, 1
      %p41 = por %p39, %p40
      %p42 = scmp.ne.s32.totalorder %s34, %s37
      %p43 = scmp.eq.s32.totalorder %s10, 0
      %p44 = por %p42, %p43
      %p45 = scmp.ne.s32.totalorder %s34, %s37
      %p46 = scmp.eq.s32.totalorder %s15, 1
      %p47 = por %p45, %p46
      %p48 = scmp.ne.s32.totalorder %s37, %s38
      %p49 = scmp.eq.s32.totalorder %s15, 0
      %p50 = por %p48, %p49
      %p51 = scmp.ne.s32.totalorder %s37, %s38
      %p52 = scmp.eq.s32.totalorder %s16, 1
      %p53 = por %p51, %p52
      %p55 = scmp.ne.s32.totalorder %s38, %s54
      %p56 = scmp.eq.s32.totalorder %s16, 0
      %p57 = por %p55, %p56
      %s58 = ssub.s32 %s17, %s29
      %s59 = ssub.s32 %s18, %s25
      %s60 = sor.u32 %s58, %s59
      %p61 = scmp.eq.s32.totalorder %s60, 0
      %s63 = sadd.s32 %s62, 1
      %s64 = scalar_select %p61, %s62, %s63
      %p67 = pneg %p61
      %p68 = scmp.eq.s32.totalorder %s10, 1
      %p69 = por %p67, %p68
      %p70 = scmp.ne.s32.totalorder %s62, %s65
      %p71 = scmp.eq.s32.totalorder %s10, 0
      %p72 = por %p70, %p71
      %p73 = scmp.ne.s32.totalorder %s62, %s65
      %p74 = scmp.eq.s32.totalorder %s15, 1
      %p75 = por %p73, %p74
      %p76 = scmp.ne.s32.totalorder %s65, %s66
      %p77 = scmp.eq.s32.totalorder %s15, 0
      %p78 = por %p76, %p77
      %p79 = scmp.ne.s32.totalorder %s65, %s66
      %p80 = scmp.eq.s32.totalorder %s16, 1
      %p81 = por %p79, %p80
      %p83 = scmp.ne.s32.totalorder %s66, %s82
      %p84 = scmp.eq.s32.totalorder %s16, 0
      %p85 = por %p83, %p84
      %p86 = scmp.le.s32.totalorder 1, %s10
      %p87 = scmp.lt.s32.totalorder %s10, 3
      %p88 = pnand %p86, %p87
      %p89 = pneg %p88
      // Predicated region
      $region9: #{tpu_custom_call.1} parent=5 // pred_check
        _
      $region10: #{tpu_custom_call.1} parent=5 // pred_check_branch
        %91 = sbr.rel (%p88) target = $region12
      $region11: #{tpu_custom_call.1} parent=5 // pred_region
        %s92 = ssub.s32 %s10, 1
      $region12: #{tpu_custom_call.1} parent=5 // pred_fallthru
        _
      %p93 = scmp.lt.s32.totalorder %s10, 2
      // Predicated region
      $region13: #{tpu_custom_call.1} parent=5 // pred_check
        %p94 = pneg %p93
      $region14: #{tpu_custom_call.1} parent=5 // pred_check_branch
        %96 = sbr.rel (%p94) target = $region16
      $region15: #{tpu_custom_call.1} parent=5 // pred_region
        // Predicated region
        $region17: #{tpu_custom_call.1} parent=15 // pred_check
          %p97 = pneg %p44
        $region18: #{tpu_custom_call.1} parent=15 // pred_check_branch
          %99 = sbr.rel (%p97) target = $region20
        $region19: #{tpu_custom_call.1} parent=15 // pred_region
          %s100 = smul.u32 2, %s18
          %p101 = scmp.lt.s32.totalorder %s17, 1
          %s102 = scalar_select %p101, %s17, 1
          %p103 = scmp.lt.s32.totalorder %s100, 1
          %s104 = scalar_select %p103, %s100, 1
          %s105 = smul.addr %s102, 2
          %s106 = sadd.s32 %s104, %s105
          %s107 = smul.addr %s106, 8
          %s108 = scalar_lea.vmem %s0, %s107
          %s109 = smul.u32 2, %s18
        $region20: #{tpu_custom_call.1} parent=15 // pred_fallthru
          _
      $region16: #{tpu_custom_call.1} parent=5 // pred_fallthru
        _
      %p110 = scmp.le.s32.totalorder 1, %s10
      %p111 = scmp.lt.s32.totalorder %s10, 3
      %p112 = pnand %p110, %p111
      %p113 = pneg %p112
      // Predicated region
      $region21: #{tpu_custom_call.1} parent=5 // pred_check
        _
      $region22: #{tpu_custom_call.1} parent=5 // pred_check_branch
        %115 = sbr.rel (%p112) target = $region24
      $region23: #{tpu_custom_call.1} parent=5 // pred_region
        %s116 = ssub.s32 %s10, 1
        %s117 = smul.u32 2, %s20
        %p118 = scmp.lt.s32.totalorder %s19, 1
        %s119 = scalar_select %p118, %s19, 1
        %p120 = scmp.lt.s32.totalorder %s117, 1
        %s121 = scalar_select %p120, %s117, 1
        %s122 = smul.addr %s119, 2
        %s123 = sadd.s32 %s121, %s122
        %s124 = smul.addr %s123, 8
        %s125 = scalar_lea.vmem %s0, %s124
        %p126 = pneg %p50
        %p127 = pneg %p47
        %p128 = pneg %p78
        %p129 = pneg %p75
        %s130 = sand.u32 %s65, 1
        %s131 = scalar_lea.sflag [#allocation3], %s130
        %s132 = sand.u32 %s65, 1
        %s133 = smul.addr %s132, 16
        %s134 = scalar_lea.vmem [#allocation2], %s133
        %s135 = smul.u32 2, %s20
        %p136 = scmp.lt.s32.totalorder %s19, 1
        %s137 = scalar_select %p136, %s19, 1
        %p138 = scmp.lt.s32.totalorder %s135, 1
        %s139 = scalar_select %p138, %s135, 1
        %s140 = smul.addr %s137, 2
        %s141 = sadd.s32 %s139, %s140
        %s142 = smul.addr %s141, 8
        %s143 = scalar_lea.vmem %s0, %s142
        %s144 = smul.u32 2, %s20
        %s145 = smul.u32 2, %s20
        %v146 = vlaneseq
        %v147 = vshrl.u32 %v146, 7
        %v148 = vadd.s32 %v147, 8
        %s149 = smul.u32 %s20, 16
        %v150 = vstv %s149
        %v151 = vadd.s32 %v147, %v150
        %v152 = vadd.s32 %v148, %v150
        %v153 = vadd.s32 %v151, 2
        %v154 = vadd.s32 %v152, 2
        %v155 = vcvt.s32.f32 %v153
        %v156 = vcvt.s32.f32 %v154
        %v157 = vlaneseq
        %v158 = vand.u32 %v157, 127
        %vm159 = vcmp.lt.s32.totalorder %v158, 16
        %v160 = vsub.s32 %v158, 16
        %v161 = vsel %vm159, %v158, %v160
        %v162 = vcvt.s32.f32 %v161
        %v163 = vmul.f32 %v162, -0.6140227
        %v164 = vmul.f32 %v163, 1.442695
        %v165 = vpow.pop %v164
        %v166 = vmul.f32 %v155, %v165
        %v167 = vmul.f32 %v156, %v165
        %v168 = vand.u32 2147483647, %v166
        %vm169 = vcmp.le.f32.partialorder %v168, 0.7853982
        %vm170 = vcmp.lt.s32.totalorder %v166, 0
        %v171 = vand.u32 %v166, 2139095040
        %v172 = vshrl.u32 %v171, 23
        %v173 = vsub.s32 %v172, 127
        %v174 = vand.u32 2147483647, %v166
        %v175 = vand.u32 %v174, 8388607
        %v176 = vor.u32 %v175, 8388608
        %v177 = vsub.s32 0, %v176
        %v178 = vadd.s32 %v173, 1
        %vm179 = vcmp.gt.s32.totalorder %v178, 0
        %v180 = vsel %vm179, %v178, 0
        %v181 = vshrl.u32 %v180, 5
        %v182 = vand.u32 %v180, 31
        %v183 = vsub.s32 32, %v182
        %v184 = vshrl.u32 683565275, %v183
        %v185 = vshll.u32 683565275, %v182
        %v186 = vshrl.u32 2475754826, %v183
        %v187 = vor.u32 %v185, %v186
        %v188 = vshll.u32 2475754826, %v182
        %v189 = vshrl.u32 2131351028, %v183
        %v190 = vor.u32 %v188, %v189
        %v191 = vshll.u32 2131351028, %v182
        %v192 = vshrl.u32 2102212464, %v183
        %v193 = vor.u32 %v191, %v192
        %v194 = vshll.u32 2102212464, %v182
        %v195 = vshrl.u32 920167782, %v183
        %v196 = vor.u32 %v194, %v195
        %v197 = vshll.u32 920167782, %v182
        %v198 = vshrl.u32 1326507024, %v183
        %v199 = vor.u32 %v197, %v198
        %vm200 = vcmp.lt.s32.totalorder %v181, 1
        %vm201 = vcmp.lt.s32.totalorder %v181, 2
        %vm202 = vcmp.lt.s32.totalorder %v181, 3
        %vm203 = vcmp.lt.s32.totalorder %v181, 4
        %v204 = vsel %vm200, %v184, %v187
        %v205 = vsel %vm203, %v193, 2102212464
        %v206 = vsel %vm202, %v190, %v205
        %v207 = vsel %vm201, %v204, %v206
        %v208 = vsel %vm200, %v187, %v190
        %v209 = vsel %vm203, %v196, 920167782
        %v210 = vsel %vm202, %v193, %v209
        %v211 = vsel %vm201, %v208, %v210
        %v212 = vsel %vm200, %v190, %v193
        %v213 = vsel %vm203, %v199, 1326507024
        %v214 = vsel %vm202, %v196, %v213
        %v215 = vsel %vm201, %v212, %v214
        %v216 = vshll.u32 %v176, 8
        %v217 = vmul.u32.u64.compose %v216, %v215
        %v218 = vextract.low.u32 %v217
        %v219 = vextract.high.u32 %v217
        %v220 = vmul.u32.u64.compose %v216, %v211
        %v221 = vextract.low.u32 %v220
        %v222 = vextract.high.u32 %v220
        %v223 = vmul.u32 %v216, %v207
        %v224 = vadd.s32 %v219, %v221
        %vm225 = vc.u32 %v219, %v221
        %v226 = vadd.s32 %v222, 1
        %v227 = vsel %vm225, %v226, %v222
        %v228 = vadd.s32 %v223, %v227
        %v229 = vadd.s32 %v228, 536870912
        %v230 = vshrl.u32 %v229, 30
        %v231 = vshll.u32 %v230, 30
        %v232 = vsub.s32 %v228, %v231
        %vm233 = vcmp.lt.s32.totalorder %v232, 0
        %v234 = vsub.s32 0, %v232
        %v235 = vsel %vm233, %v234, %v232
        %v236 = vclz %v235
        %v237 = vsub.s32 %v236, 2
        %vm238 = vcmp.gt.s32.totalorder 0, %v237
        %v239 = vsel %vm238, 0, %v237
        %v240 = vsub.s32 32, %v239
        %v241 = vshll.u32 %v232, %v239
        %v242 = vshrl.u32 %v224, %v240
        %v243 = vor.u32 %v241, %v242
        %v244 = vsub.s32 4294967266, %v239
        %v245 = vadd.s32 %v244, 127
        %v246 = vshll.u32 %v245, 23
        %v247 = vor.u32 4788187, %v246
        %v248 = vand.u32 2147483647, %v247
        %v250 = vcvt.s32.f32 %v243
        %v251 = vmul.f32 %v250, %v248
        %v252 = vxor.u32 %v251, 2147483648
        %v253 = vsel %vm170, %v252, %v251
        %v254 = vsub.s32 4, %v230
        %v255 = vsel %vm170, %v254, %v230
        %v256 = vsel %vm169, %v166, %v253
        %v257 = vsel %vm169, 0, %v255
        %v258 = vcosq.f32.pop %v256
        %v259 = vsinq.f32.pop %v256
        %vm260 = vweird.f32 %v166
        %v261 = vadd.s32 %v257, 3
        %v262 = vand.u32 %v261, 3
        %vm263 = vcmp.lt.s32.totalorder %v262, 2
        %vm264 = vcmp.eq.s32.totalorder %v262, 0
        %v265 = vxor.u32 %v259, 2147483648
        %v266 = vsel %vm264, %v258, %v265
        %vm267 = vcmp.eq.s32.totalorder %v262, 2
        %v268 = vxor.u32 %v258, 2147483648
        %v269 = vsel %vm267, %v268, %v259
        %v270 = vsel %vm263, %v266, %v269
        %v271 = vsel %vm260, nan, %v270
        %v272 = vand.u32 2147483647, %v167
        %vm273 = vcmp.le.f32.partialorder %v272, 0.7853982
        %vm274 = vcmp.lt.s32.totalorder %v167, 0
        %v275 = vand.u32 %v167, 2139095040
        %v276 = vshrl.u32 %v275, 23
        %v277 = vsub.s32 %v276, 127
        %v278 = vand.u32 2147483647, %v167
        %v279 = vand.u32 %v278, 8388607
        %v280 = vor.u32 %v279, 8388608
        %v281 = vsub.s32 0, %v280
        %v282 = vadd.s32 %v277, 1
        %vm283 = vcmp.gt.s32.totalorder %v282, 0
        %v284 = vsel %vm283, %v282, 0
        %v285 = vshrl.u32 %v284, 5
        %v286 = vand.u32 %v284, 31
        %v287 = vsub.s32 32, %v286
        %v288 = vshrl.u32 683565275, %v287
        %v289 = vshll.u32 683565275, %v286
        %v290 = vshrl.u32 2475754826, %v287
        %v291 = vor.u32 %v289, %v290
        %v292 = vshll.u32 2475754826, %v286
        %v293 = vshrl.u32 2131351028, %v287
        %v294 = vor.u32 %v292, %v293
        %v295 = vshll.u32 2131351028, %v286
        %v296 = vshrl.u32 2102212464, %v287
        %v297 = vor.u32 %v295, %v296
        %v298 = vshll.u32 2102212464, %v286
        %v299 = vshrl.u32 920167782, %v287
        %v300 = vor.u32 %v298, %v299
        %v301 = vshll.u32 920167782, %v286
        %v302 = vshrl.u32 1326507024, %v287
        %v303 = vor.u32 %v301, %v302
        %vm304 = vcmp.lt.s32.totalorder %v285, 1
        %vm305 = vcmp.lt.s32.totalorder %v285, 2
        %vm306 = vcmp.lt.s32.totalorder %v285, 3
        %vm307 = vcmp.lt.s32.totalorder %v285, 4
        %v308 = vsel %vm304, %v288, %v291
        %v309 = vsel %vm307, %v297, 2102212464
        %v310 = vsel %vm306, %v294, %v309
        %v311 = vsel %vm305, %v308, %v310
        %v312 = vsel %vm304, %v291, %v294
        %v313 = vsel %vm307, %v300, 920167782
        %v314 = vsel %vm306, %v297, %v313
        %v315 = vsel %vm305, %v312, %v314
        %v316 = vsel %vm304, %v294, %v297
        %v317 = vsel %vm307, %v303, 1326507024
        %v318 = vsel %vm306, %v300, %v317
        %v319 = vsel %vm305, %v316, %v318
        %v320 = vshll.u32 %v280, 8
        %v321 = vmul.u32.u64.compose %v320, %v319
        %v322 = vextract.low.u32 %v321
        %v323 = vextract.high.u32 %v321
        %v324 = vmul.u32.u64.compose %v320, %v315
        %v325 = vextract.low.u32 %v324
        %v326 = vextract.high.u32 %v324
        %v327 = vmul.u32 %v320, %v311
        %v328 = vadd.s32 %v323, %v325
        %vm329 = vc.u32 %v323, %v325
        %v330 = vadd.s32 %v326, 1
        %v331 = vsel %vm329, %v330, %v326
        %v332 = vadd.s32 %v327, %v331
        %v333 = vadd.s32 %v332, 536870912
        %v334 = vshrl.u32 %v333, 30
        %v335 = vshll.u32 %v334, 30
        %v336 = vsub.s32 %v332, %v335
        %vm337 = vcmp.lt.s32.totalorder %v336, 0
        %v338 = vsub.s32 0, %v336
        %v339 = vsel %vm337, %v338, %v336
        %v340 = vclz %v339
        %v341 = vsub.s32 %v340, 2
        %vm342 = vcmp.gt.s32.totalorder 0, %v341
        %v343 = vsel %vm342, 0, %v341
        %v344 = vsub.s32 32, %v343
        %v345 = vshll.u32 %v336, %v343
        %v346 = vshrl.u32 %v328, %v344
        %v347 = vor.u32 %v345, %v346
        %v348 = vsub.s32 4294967266, %v343
        %v349 = vadd.s32 %v348, 127
        %v350 = vshll.u32 %v349, 23
        %v351 = vor.u32 4788187, %v350
        %v352 = vand.u32 2147483647, %v351
        %v354 = vcvt.s32.f32 %v347
        %v355 = vmul.f32 %v354, %v352
        %v356 = vxor.u32 %v355, 2147483648
        %v357 = vsel %vm274, %v356, %v355
        %v358 = vsub.s32 4, %v334
        %v359 = vsel %vm274, %v358, %v334
        %v360 = vsel %vm273, %v167, %v357
        %v361 = vsel %vm273, 0, %v359
        %v362 = vcosq.f32.pop %v360
        %v363 = vsinq.f32.pop %v360
        %vm364 = vweird.f32 %v167
        %v365 = vadd.s32 %v361, 3
        %v366 = vand.u32 %v365, 3
        %vm367 = vcmp.lt.s32.totalorder %v366, 2
        %vm368 = vcmp.eq.s32.totalorder %v366, 0
        %v369 = vxor.u32 %v363, 2147483648
        %v370 = vsel %vm368, %v362, %v369
        %vm371 = vcmp.eq.s32.totalorder %v366, 2
        %v372 = vxor.u32 %v362, 2147483648
        %v373 = vsel %vm371, %v372, %v363
        %v374 = vsel %vm367, %v370, %v373
        %v375 = vsel %vm364, nan, %v374
        %v376 = vand.u32 2147483647, %v166
        %vm377 = vcmp.le.f32.partialorder %v376, 0.7853982
        %vm378 = vcmp.lt.s32.totalorder %v166, 0
        %v379 = vand.u32 %v166, 2139095040
        %v380 = vshrl.u32 %v379, 23
        %v381 = vsub.s32 %v380, 127
        %v382 = vand.u32 2147483647, %v166
        %v383 = vand.u32 %v382, 8388607
        %v384 = vor.u32 %v383, 8388608
        %v385 = vsub.s32 0, %v384
        %v386 = vadd.s32 %v381, 1
        %vm387 = vcmp.gt.s32.totalorder %v386, 0
        %v388 = vsel %vm387, %v386, 0
        %v389 = vshrl.u32 %v388, 5
        %v390 = vand.u32 %v388, 31
        %v391 = vsub.s32 32, %v390
        %v392 = vshrl.u32 683565275, %v391
        %v393 = vshll.u32 683565275, %v390
        %v394 = vshrl.u32 2475754826, %v391
        %v395 = vor.u32 %v393, %v394
        %v396 = vshll.u32 2475754826, %v390
        %v397 = vshrl.u32 2131351028, %v391
        %v398 = vor.u32 %v396, %v397
        %v399 = vshll.u32 2131351028, %v390
        %v400 = vshrl.u32 2102212464, %v391
        %v401 = vor.u32 %v399, %v400
        %v402 = vshll.u32 2102212464, %v390
        %v403 = vshrl.u32 920167782, %v391
        %v404 = vor.u32 %v402, %v403
        %v405 = vshll.u32 920167782, %v390
        %v406 = vshrl.u32 1326507024, %v391
        %v407 = vor.u32 %v405, %v406
        %vm408 = vcmp.lt.s32.totalorder %v389, 1
        %vm409 = vcmp.lt.s32.totalorder %v389, 2
        %vm410 = vcmp.lt.s32.totalorder %v389, 3
        %vm411 = vcmp.lt.s32.totalorder %v389, 4
        %v412 = vsel %vm408, %v392, %v395
        %v413 = vsel %vm411, %v401, 2102212464
        %v414 = vsel %vm410, %v398, %v413
        %v415 = vsel %vm409, %v412, %v414
        %v416 = vsel %vm408, %v395, %v398
        %v417 = vsel %vm411, %v404, 920167782
        %v418 = vsel %vm410, %v401, %v417
        %v419 = vsel %vm409, %v416, %v418
        %v420 = vsel %vm408, %v398, %v401
        %v421 = vsel %vm411, %v407, 1326507024
        %v422 = vsel %vm410, %v404, %v421
        %v423 = vsel %vm409, %v420, %v422
        %v424 = vshll.u32 %v384, 8
        %v425 = vmul.u32.u64.compose %v424, %v423
        %v426 = vextract.low.u32 %v425
        %v427 = vextract.high.u32 %v425
        %v428 = vmul.u32.u64.compose %v424, %v419
        %v429 = vextract.low.u32 %v428
        %v430 = vextract.high.u32 %v428
        %v431 = vmul.u32 %v424, %v415
        %v432 = vadd.s32 %v427, %v429
        %vm433 = vc.u32 %v427, %v429
        %v434 = vadd.s32 %v430, 1
        %v435 = vsel %vm433, %v434, %v430
        %v436 = vadd.s32 %v431, %v435
        %v437 = vadd.s32 %v436, 536870912
        %v438 = vshrl.u32 %v437, 30
        %v439 = vshll.u32 %v438, 30
        %v440 = vsub.s32 %v436, %v439
        %vm441 = vcmp.lt.s32.totalorder %v440, 0
        %v442 = vsub.s32 0, %v440
        %v443 = vsel %vm441, %v442, %v440
        %v444 = vclz %v443
        %v445 = vsub.s32 %v444, 2
        %vm446 = vcmp.gt.s32.totalorder 0, %v445
        %v447 = vsel %vm446, 0, %v445
        %v448 = vsub.s32 32, %v447
        %v449 = vshll.u32 %v440, %v447
        %v450 = vshrl.u32 %v432, %v448
        %v451 = vor.u32 %v449, %v450
        %v452 = vsub.s32 4294967266, %v447
        %v453 = vadd.s32 %v452, 127
        %v454 = vshll.u32 %v453, 23
        %v455 = vor.u32 4788187, %v454
        %v456 = vand.u32 2147483647, %v455
        %v458 = vcvt.s32.f32 %v451
        %v459 = vmul.f32 %v458, %v456
        %v460 = vxor.u32 %v459, 2147483648
        %v461 = vsel %vm378, %v460, %v459
        %v462 = vsub.s32 4, %v438
        %v463 = vsel %vm378, %v462, %v438
        %v464 = vsel %vm377, %v166, %v461
        %v465 = vsel %vm377, 0, %v463
        %v466 = vcosq.f32.pop %v464
        %v467 = vsinq.f32.pop %v464
        %vm468 = vweird.f32 %v166
        %v469 = vand.u32 %v465, 3
        %vm470 = vcmp.lt.s32.totalorder %v469, 2
        %vm471 = vcmp.eq.s32.totalorder %v469, 0
        %v472 = vxor.u32 %v467, 2147483648
        %v473 = vsel %vm471, %v466, %v472
        %vm474 = vcmp.eq.s32.totalorder %v469, 2
        %v475 = vxor.u32 %v466, 2147483648
        %v476 = vsel %vm474, %v475, %v467
        %v477 = vsel %vm470, %v473, %v476
        %v478 = vsel %vm468, nan, %v477
        %v479 = vand.u32 2147483647, %v167
        %vm480 = vcmp.le.f32.partialorder %v479, 0.7853982
        %vm481 = vcmp.lt.s32.totalorder %v167, 0
        %v482 = vand.u32 %v167, 2139095040
        %v483 = vshrl.u32 %v482, 23
        %v484 = vsub.s32 %v483, 127
        %v485 = vand.u32 2147483647, %v167
        %v486 = vand.u32 %v485, 8388607
        %v487 = vor.u32 %v486, 8388608
        %v488 = vsub.s32 0, %v487
        %v489 = vadd.s32 %v484, 1
        %vm490 = vcmp.gt.s32.totalorder %v489, 0
        %v491 = vsel %vm490, %v489, 0
        %v492 = vshrl.u32 %v491, 5
        %v493 = vand.u32 %v491, 31
        %v494 = vsub.s32 32, %v493
        %v495 = vshrl.u32 683565275, %v494
        %v496 = vshll.u32 683565275, %v493
        %v497 = vshrl.u32 2475754826, %v494
        %v498 = vor.u32 %v496, %v497
        %v499 = vshll.u32 2475754826, %v493
        %v500 = vshrl.u32 2131351028, %v494
        %v501 = vor.u32 %v499, %v500
        %v502 = vshll.u32 2131351028, %v493
        %v503 = vshrl.u32 2102212464, %v494
        %v504 = vor.u32 %v502, %v503
        %v505 = vshll.u32 2102212464, %v493
        %v506 = vshrl.u32 920167782, %v494
        %v507 = vor.u32 %v505, %v506
        %v508 = vshll.u32 920167782, %v493
        %v509 = vshrl.u32 1326507024, %v494
        %v510 = vor.u32 %v508, %v509
        %vm511 = vcmp.lt.s32.totalorder %v492, 1
        %vm512 = vcmp.lt.s32.totalorder %v492, 2
        %vm513 = vcmp.lt.s32.totalorder %v492, 3
        %vm514 = vcmp.lt.s32.totalorder %v492, 4
        %v515 = vsel %vm511, %v495, %v498
        %v516 = vsel %vm514, %v504, 2102212464
        %v517 = vsel %vm513, %v501, %v516
        %v518 = vsel %vm512, %v515, %v517
        %v519 = vsel %vm511, %v498, %v501
        %v520 = vsel %vm514, %v507, 920167782
        %v521 = vsel %vm513, %v504, %v520
        %v522 = vsel %vm512, %v519, %v521
        %v523 = vsel %vm511, %v501, %v504
        %v524 = vsel %vm514, %v510, 1326507024
        %v525 = vsel %vm513, %v507, %v524
        %v526 = vsel %vm512, %v523, %v525
        %v527 = vshll.u32 %v487, 8
        %v528 = vmul.u32.u64.compose %v527, %v526
        %v529 = vextract.low.u32 %v528
        %v530 = vextract.high.u32 %v528
        %v531 = vmul.u32.u64.compose %v527, %v522
        %v532 = vextract.low.u32 %v531
        %v533 = vextract.high.u32 %v531
        %v534 = vmul.u32 %v527, %v518
        %v535 = vadd.s32 %v530, %v532
        %vm536 = vc.u32 %v530, %v532
        %v537 = vadd.s32 %v533, 1
        %v538 = vsel %vm536, %v537, %v533
        %v539 = vadd.s32 %v534, %v538
        %v540 = vadd.s32 %v539, 536870912
        %v541 = vshrl.u32 %v540, 30
        %v542 = vshll.u32 %v541, 30
        %v543 = vsub.s32 %v539, %v542
        %vm544 = vcmp.lt.s32.totalorder %v543, 0
        %v545 = vsub.s32 0, %v543
        %v546 = vsel %vm544, %v545, %v543
        %v547 = vclz %v546
        %v548 = vsub.s32 %v547, 2
        %vm549 = vcmp.gt.s32.totalorder 0, %v548
        %v550 = vsel %vm549, 0, %v548
        %v551 = vsub.s32 32, %v550
        %v552 = vshll.u32 %v543, %v550
        %v553 = vshrl.u32 %v535, %v551
        %v554 = vor.u32 %v552, %v553
        %v555 = vsub.s32 4294967266, %v550
        %v556 = vadd.s32 %v555, 127
        %v557 = vshll.u32 %v556, 23
        %v558 = vor.u32 4788187, %v557
        %v559 = vand.u32 2147483647, %v558
        %v561 = vcvt.s32.f32 %v554
        %v562 = vmul.f32 %v561, %v559
        %v563 = vxor.u32 %v562, 2147483648
        %v564 = vsel %vm481, %v563, %v562
        %v565 = vsub.s32 4, %v541
        %v566 = vsel %vm481, %v565, %v541
        %v567 = vsel %vm480, %v167, %v564
        %v568 = vsel %vm480, 0, %v566
        %v569 = vcosq.f32.pop %v567
        %v570 = vsinq.f32.pop %v567
        %vm571 = vweird.f32 %v167
        %v572 = vand.u32 %v568, 3
        %vm573 = vcmp.lt.s32.totalorder %v572, 2
        %vm574 = vcmp.eq.s32.totalorder %v572, 0
        %v575 = vxor.u32 %v570, 2147483648
        %v576 = vsel %vm574, %v569, %v575
        %vm577 = vcmp.eq.s32.totalorder %v572, 2
        %v578 = vxor.u32 %v569, 2147483648
        %v579 = vsel %vm577, %v578, %v570
        %v580 = vsel %vm573, %v576, %v579
        %v581 = vsel %vm571, nan, %v580
        %v582 = vsel %vm159, %v271, %v478
        %v583 = vsel %vm159, %v375, %v581
        %v584 = vld [vmem:[%s143] sm:$0xff]
        %v585 = vld [vmem:[%s143 + $0x8] sm:$0xff]
        %vm586 = vcmp.ne.s32.totalorder %v584, 1
        %vm587 = vcmp.ne.s32.totalorder %v585, 1
        %v588 = vsel %vm586, 1, 0
        %v589 = vsel %vm587, 1, 0
        %590 = vset.pattern.permute.xlu0 0
        %591 = vperm.xlu0 %590, %v588
        %v592 = vpop.permute.xlu0 %591
        %593 = vset.pattern.permute.xlu0 0
        %594 = vperm.xlu0 %593, %v589
        %v595 = vpop.permute.xlu0 %594
        %vm596 = vcmp.eq.s32.totalorder %v592, 1
        %vm597 = vcmp.eq.s32.totalorder %v595, 1
        %v598 = vsel %vm596, %v582, 0.0
        %v599 = vsel %vm597, %v583, 0.0
        %vm600 = vcmask 261120
        %601 = vst.msk [vmem:[%s134] sm:$0xff] %vm600, %v598
        %602 = vst.msk [vmem:[%s134 + $0x8] sm:$0xff] %vm600, %v599
        %s603 = sand.u32 %s65, 1
        %s604 = scalar_lea.sflag [#allocation3], %s603
        %s605 = sand.u32 %s65, 1
        %s606 = smul.addr %s605, 16
        %s607 = scalar_lea.vmem [#allocation2], %s606
        // Predicated region
        $region25: #{tpu_custom_call.1} parent=23 // pred_check
          %p608 = pneg %p75
        $region26: #{tpu_custom_call.1} parent=23 // pred_check_branch
          %610 = sbr.rel (%p608) target = $region28
        $region27: #{tpu_custom_call.1} parent=23 // pred_region
          %s611 = smul.u32 2, %s20
          %s613 = ssub.s32 256, 256
          %614 = vsyncadd %s604, %s613
          %s615 = smul.addr %s19, 2
          %s616 = sadd.s32 %s611, %s615
          %s617 = smul.addr %s616, 128
          %s618 = scalar_lea.hbm %s1, %s617
          %s619 = sshll.u32 %s607, 4
          %s620 = int_to_ptr.vmem [resolvable:$true] %s619
          %625 = dma.vmem_to_hbm [thread:$0]  %s620, 256, %s618, %s604, 128, 128, 8
        $region28: #{tpu_custom_call.1} parent=23 // pred_fallthru
          _
      $region24: #{tpu_custom_call.1} parent=5 // pred_fallthru
        _
      %p626 = scmp.le.s32.totalorder 2, %s10
      // Predicated region
      $region29: #{tpu_custom_call.1} parent=5 // pred_check
        %p627 = pneg %p626
      $region30: #{tpu_custom_call.1} parent=5 // pred_check_branch
        %629 = sbr.rel (%p627) target = $region32
      $region31: #{tpu_custom_call.1} parent=5 // pred_region
        %s630 = ssub.s32 %s10, 2
        // Predicated region
        $region33: #{tpu_custom_call.1} parent=31 // pred_check
          %p631 = pneg %p81
        $region34: #{tpu_custom_call.1} parent=31 // pred_check_branch
          %633 = sbr.rel (%p631) target = $region36
        $region35: #{tpu_custom_call.1} parent=31 // pred_region
          %s634 = sand.u32 %s66, 1
          %s635 = scalar_lea.sflag [#allocation3], %s634
          %s636 = sand.u32 %s66, 1
          %s637 = smul.addr %s636, 16
          %s638 = scalar_lea.vmem [#allocation2], %s637
          %639 = dma.done %s635, 256
        $region36: #{tpu_custom_call.1} parent=31 // pred_fallthru
          _
      $region32: #{tpu_custom_call.1} parent=5 // pred_fallthru
        _
    $region6: #{tpu_custom_call.1} parent=1 // loop_footer
      %s14 = sadd.s32 1, %s10
    $region7: #{tpu_custom_call.1} parent=1 // loop_footer_branch
      %9 = sbr.rel target = $region3
    $region8: #{tpu_custom_call.1} parent=1 // loop_exit
      _
    %640 = vsyncpa [#allocation3], 1
    %s641 = scalar_lea.sflag [#allocation3], 1
    %642 = vsyncpa %s641, 1

</llo_original>
